<compile_context>
chip_gen: v5e
topology: v5e:2x2
jax: 0.10.0
libtpu: 0.0.40
codegen_flags: <defaults>
</compile_context>

<pallas_src>
import functools
import math

import jax
import jax.numpy as jnp
from jax.experimental import pallas as pl
from jax.experimental.pallas import tpu as pltpu


def _pos_enc_kernel(x_ref, pe_ref, o_ref, *, batch: int):
    # x_ref : (tS, B*D) in VMEM (lane-dense)
    # pe_ref: (tS, D)   in VMEM, already in x's dtype
    # o_ref : (tS, B*D) in VMEM
    pe_tiled = jnp.tile(pe_ref[...], (1, batch))  # (tS, B*D)
    o_ref[...] = x_ref[...] + pe_tiled


def make_pe_table(d_model: int, max_len: int, dtype=jnp.float32) -> jnp.ndarray:
    """Build the [max_len, d_model] sinusoidal table once (plain JAX glue)."""
    position = jnp.arange(0, max_len, dtype=jnp.float32)[:, None]            # (L, 1)
    div_term = jnp.exp(
        jnp.arange(0, d_model, 2, dtype=jnp.float32)
        * (-math.log(10000.0) / d_model)
    )                                                                         # (ceil(D/2),)
    angles = position * div_term                                              # (L, ceil(D/2))
    pe = jnp.zeros((max_len, d_model), dtype=jnp.float32)
    pe = pe.at[:, 0::2].set(jnp.sin(angles))
    # Guard odd d_model: cos columns = floor(D/2).
    pe = pe.at[:, 1::2].set(jnp.cos(angles[:, : d_model // 2]))
    return pe.astype(dtype)


def _round_up(x: int, m: int) -> int:
    return (x + m - 1) // m * m


def _choose_seq_tile(S: int, row_bytes_padded: int, target_block_bytes: int,
                     pack: int, min_grid_steps: int) -> int:
    """Largest pack-aligned seq tile with ~target_block_bytes true block size,
    capped so the grid has >= min_grid_steps steps when S allows it."""
    t = max(pack, (target_block_bytes // max(row_bytes_padded, 1)) // pack * pack)
    cap = (S // min_grid_steps) // pack * pack
    if cap >= pack:
        t = min(t, cap)
    if t >= S:
        return S  # single full-dim block (always a legal block shape)
    return int(t)


def positional_encoding(x: jnp.ndarray, pe: jnp.ndarray, *,
                        seq_tile: int | None = None,
                        target_block_bytes: int = 1 << 20,
                        min_grid_steps: int = 8) -> jnp.ndarray:
    """x: [S, B, D], pe: [max_len, D] (same dtype as x). Returns [S, B, D]."""
    S, B, D = x.shape
    max_len, d_pe = pe.shape
    assert d_pe == D and max_len >= S
    if pe.dtype != x.dtype:
        # Hoisted one-time cast; normally make_pe_table is built in x.dtype.
        pe = pe.astype(x.dtype)

    itemsize = jnp.dtype(x.dtype).itemsize
    # Native sublane packing: f32 -> 8, bf16 -> 16, int8/fp8 -> 32.
    pack = 8 if itemsize >= 4 else (16 if itemsize == 2 else 32)
    # Padding-aware per-row bytes of the folded [S, B*D] block.
    row_bytes_padded = _round_up(B * D, 128) * itemsize

    if seq_tile is None:
        seq_tile = _choose_seq_tile(S, row_bytes_padded, target_block_bytes,
                                    pack, min_grid_steps)
    assert seq_tile == S or seq_tile % 8 == 0, (
        "seq_tile must equal S or be a multiple of 8 (sublane)")

    # If we use a single full-sequence block and S is not a multiple of 8, the
    # pe block (seq_tile, D) would be neither 8-aligned nor full-dim on the
    # [max_len, D] table: slice pe so its block is full-dim too (cheap, one-off).
    if seq_tile == S and S % 8 != 0 and S != max_len:
        pe = pe[:S]

    grid = (pl.cdiv(S, seq_tile),)

    x2d = x.reshape(S, B * D)  # free, row-major: lane-dense layout
    kernel = functools.partial(_pos_enc_kernel, batch=B)

    out2d = pl.pallas_call(
        kernel,
        out_shape=jax.ShapeDtypeStruct((S, B * D), x.dtype),
        grid_spec=pltpu.PrefetchScalarGridSpec(
            num_scalar_prefetch=0,
            grid=grid,
            in_specs=[
                pl.BlockSpec((seq_tile, B * D), lambda i: (i, 0)),
                pl.BlockSpec((seq_tile, D), lambda i: (i, 0)),
            ],
            out_specs=pl.BlockSpec((seq_tile, B * D), lambda i: (i, 0)),
        ),
        compiler_params=pltpu.CompilerParams(
            dimension_semantics=("parallel",),
        ),
    )(x2d, pe)

    return out2d.reshape(S, B, D)


if __name__ == "__main__":
    # Small shapes consistent with forward: x is [seq, batch, d_model].
    # seq_len is deliberately NOT a multiple of every tile tried below so the
    # cdiv / boundary-padded tail path is exercised.
    seq_len, batch, d_model = 40, 2, 32
    max_len = 64  # synthetic small max_len (module default is 5000)

    key = jax.random.PRNGKey(0)
    x = jax.random.normal(key, (seq_len, batch, d_model), dtype=jnp.float32)
    pe = make_pe_table(d_model, max_len, dtype=x.dtype)

    # Reference in plain JAX (eval-mode dropout == identity).
    ref = x + pe[:seq_len][:, None, :]

    # 1) Auto-sized tile (here the whole sequence fits in one ~1 MiB block).
    out = jax.block_until_ready(positional_encoding(x, pe))
    assert out.shape == (seq_len, batch, d_model)
    assert jnp.allclose(out, ref, atol=1e-6, rtol=1e-6)

    # 2) Explicit small tile that divides S evenly (grid=5), same result.
    out2 = jax.block_until_ready(positional_encoding(x, pe, seq_tile=8))
    assert jnp.allclose(out2, ref, atol=1e-6, rtol=1e-6)

    # 3) Explicit tile with an uneven tail block (grid=3), same result.
    out3 = jax.block_until_ready(positional_encoding(x, pe, seq_tile=16))
    assert jnp.allclose(out3, ref, atol=1e-6, rtol=1e-6)

    # 4) bf16 end-to-end (pure bandwidth kernel -> ~2x); relaxed tolerance.
    xb = x.astype(jnp.bfloat16)
    peb = make_pe_table(d_model, max_len, dtype=jnp.bfloat16)
    outb = jax.block_until_ready(positional_encoding(xb, peb))
    refb = xb.astype(jnp.float32) + peb[:seq_len].astype(jnp.float32)[:, None, :]
    assert jnp.allclose(outb.astype(jnp.float32), refb, atol=3e-2, rtol=3e-2)

    print("KERNEL_OK")
</pallas_src>

<mosaic_0001>
module attributes {stable_mosaic.version = 11 : i64} {
  func.func @_pos_enc_kernel(%arg0: i32, %arg1: memref<40x64xf32, #tpu.memory_space<vmem>>, %arg2: memref<40x32xf32, #tpu.memory_space<vmem>>, %arg3: memref<40x64xf32, #tpu.memory_space<vmem>>) attributes {dimension_semantics = [#tpu.dimension_semantics<parallel>], iteration_bounds = array<i64: 1>, scalar_prefetch = 0 : i64, scratch_operands = 0 : i64, tpu.core_type = #tpu.core_type<tc>, window_params = [{transform_indices = @transform_0, window_bounds = array<i64: 40, 64>}, {transform_indices = @transform_1, window_bounds = array<i64: 40, 32>}, {transform_indices = @transform_2, window_bounds = array<i64: 40, 64>}]} {
    %c0 = arith.constant 0 : index
    %c0_0 = arith.constant 0 : index
    %0 = vector.load %arg2[%c0, %c0_0] : memref<40x32xf32, #tpu.memory_space<vmem>>, vector<40x32xf32>
    %1 = tpu.concatenate %0, %0 in 1 : vector<40x32xf32>, vector<40x32xf32> -> vector<40x64xf32>
    %c0_1 = arith.constant 0 : index
    %c0_2 = arith.constant 0 : index
    %2 = vector.load %arg1[%c0_1, %c0_2] : memref<40x64xf32, #tpu.memory_space<vmem>>, vector<40x64xf32>
    %3 = arith.addf %2, %1 : vector<40x64xf32>
    %c0_3 = arith.constant 0 : index
    %c0_4 = arith.constant 0 : index
    %4 = vector.load %arg3[%c0_3, %c0_4] : memref<40x64xf32, #tpu.memory_space<vmem>>, vector<40x64xf32>
    tpu.vector_store %arg3[%c0_3, %c0_4], %3 {strides = array<i32>} : memref<40x64xf32, #tpu.memory_space<vmem>>, vector<40x64xf32>,
    return
  }
  func.func @transform_0(%arg0: i32) -> (i32, i32) {
    %c0_i32 = arith.constant 0 : i32
    %c0_i32_0 = arith.constant 0 : i32
    return %arg0, %c0_i32 : i32, i32
  }
  func.func @transform_1(%arg0: i32) -> (i32, i32) {
    %c0_i32 = arith.constant 0 : i32
    %c0_i32_0 = arith.constant 0 : i32
    return %arg0, %c0_i32 : i32, i32
  }
  func.func @transform_2(%arg0: i32) -> (i32, i32) {
    %c0_i32 = arith.constant 0 : i32
    %c0_i32_0 = arith.constant 0 : i32
    return %arg0, %c0_i32 : i32, i32
  }
}

</mosaic_0001>

<llo_original>
// kernel: tpu_custom_call.1
$region0: #{tpu_custom_call.1}
  #allocation0 [shape = 'u32[]', space=smem, size = 0x4, offset = 0x4, fixed_abs, tag = 'smem constant byte address 0x4 - core index']
  #allocation1 [shape = 'u32[72,128]{1,0:T(1,128)}', space=vmem, size = 0x9000, scoped, tag = 'internal scratch']
  %s0 = inlined_call_operand.vmem [shape: f32[40,64], index: 0, kind: input, shape index: {}]
  %s1 = inlined_call_operand.vmem [shape: f32[64,32], index: 1, kind: input, shape index: {}]
  %s2 = inlined_call_operand.hbm [shape: f32[40,64], index: 2, kind: output, shape index: {}]
  %s3 = sld [smem:[#allocation0]]
  $region18: #{tpu_custom_call.1} parent=0
    _
  %s5 = ssub.s32 1, %s3
  %s6 = scalar_select 0, %s5, %s3
  $region1: #{tpu_custom_call.1} parent=0
    #allocation2 [shape = 'u8[20480]{0}', space=vmem, size = 0x5000, scoped, tag = 'output window, operand 0, single buffered']
    #allocation3 [shape = 's32[1]{0}', space=sflag, size = 0x4, scoped, tag = 'scoped memory for tpu_custom_call.1']
    %7 = vsyncpa [#allocation3], 0
    // Predicated region
    $region2: #{tpu_custom_call.1} parent=1 // pred_check
      _
    $region3: #{tpu_custom_call.1} parent=1 // pred_check_branch
      %9 = sbr.rel (0) target = $region5
    $region4: #{tpu_custom_call.1} parent=1 // pred_region
      _
    $region5: #{tpu_custom_call.1} parent=1 // pred_fallthru
      _
    // Predicated region
    $region6: #{tpu_custom_call.1} parent=1 // pred_check
      _
    $region7: #{tpu_custom_call.1} parent=1 // pred_check_branch
      %11 = sbr.rel (0) target = $region9
    $region8: #{tpu_custom_call.1} parent=1 // pred_region
      _
    $region9: #{tpu_custom_call.1} parent=1 // pred_fallthru
      _
    %v12 = vld [vmem:[%s1] sm:$0xff]
    %v13 = vld [vmem:[%s1 + $0x8] sm:$0xff]
    %v14 = vld [vmem:[%s1 + $0x10] sm:$0xff]
    %v15 = vld [vmem:[%s1 + $0x18] sm:$0xff]
    %v16 = vld [vmem:[%s1 + $0x20] sm:$0xff]
    %22 = vrot.lane.b32.xlu0 %v12, 32
    %v23 = vpop.permute.xlu0 %22
    %24 = vrot.lane.b32.xlu0 %v13, 32
    %v25 = vpop.permute.xlu0 %24
    %26 = vrot.lane.b32.xlu0 %v14, 32
    %v27 = vpop.permute.xlu0 %26
    %28 = vrot.lane.b32.xlu0 %v15, 32
    %v29 = vpop.permute.xlu0 %28
    %30 = vrot.lane.b32.xlu0 %v16, 32
    %v31 = vpop.permute.xlu0 %30
    %vm37 = vcmask 261120
    %v38 = vsel %vm37, %v12, %v23
    %v39 = vsel %vm37, %v13, %v25
    %v40 = vsel %vm37, %v14, %v27
    %v41 = vsel %vm37, %v15, %v29
    %v42 = vsel %vm37, %v16, %v31
    %v43 = vld [vmem:[%s0] sm:$0xff]
    %v44 = vld [vmem:[%s0 + $0x8] sm:$0xff]
    %v45 = vld [vmem:[%s0 + $0x10] sm:$0xff]
    %v46 = vld [vmem:[%s0 + $0x18] sm:$0xff]
    %v47 = vld [vmem:[%s0 + $0x20] sm:$0xff]
    %v48 = vadd.f32 %v43, %v38
    %v49 = vadd.f32 %v44, %v39
    %v50 = vadd.f32 %v45, %v40
    %v51 = vadd.f32 %v46, %v41
    %v52 = vadd.f32 %v47, %v42
    %vm53 = vcmask 523264
    %54 = vst.msk [vmem:[#allocation2] sm:$0xff] %vm53, %v48
    %55 = vst.msk [vmem:[#allocation2 + $0x8] sm:$0xff] %vm53, %v49
    %56 = vst.msk [vmem:[#allocation2 + $0x10] sm:$0xff] %vm53, %v50
    %57 = vst.msk [vmem:[#allocation2 + $0x18] sm:$0xff] %vm53, %v51
    %58 = vst.msk [vmem:[#allocation2 + $0x20] sm:$0xff] %vm53, %v52
    // Predicated region
    $region10: #{tpu_custom_call.1} parent=1 // pred_check
      _
    $region11: #{tpu_custom_call.1} parent=1 // pred_check_branch
      %60 = sbr.rel (0) target = $region13
    $region12: #{tpu_custom_call.1} parent=1 // pred_region
      %62 = vsyncadd [#allocation3], 0
      %s63 = sshll.u32 [#allocation2], 4
      %s64 = int_to_ptr.vmem [resolvable:$true] %s63
      %s65 = sshll.u32 %s2, 4
      %s66 = int_to_ptr.hbm [resolvable:$true] %s65
      %71 = dma.vmem_to_hbm [thread:$0]  %s64, 640, %s66, [#allocation3], 128, 128, 8
    $region13: #{tpu_custom_call.1} parent=1 // pred_fallthru
      _
    // Predicated region
    $region14: #{tpu_custom_call.1} parent=1 // pred_check
      _
    $region15: #{tpu_custom_call.1} parent=1 // pred_check_branch
      %73 = sbr.rel (0) target = $region17
    $region16: #{tpu_custom_call.1} parent=1 // pred_region
      %75 = dma.done [#allocation3], 640
    $region17: #{tpu_custom_call.1} parent=1 // pred_fallthru
      _
    %76 = vsyncpa [#allocation3], 1

</llo_original>
